<compile_context>
chip_gen: v6e
topology: v6e:2x2x1
jax: 0.10.0
libtpu: 0.0.40
codegen_flags: <defaults>
</compile_context>

<pallas_src>
import functools

import jax
import jax.numpy as jnp
from jax.experimental import pallas as pl
from jax.experimental.pallas import tpu as pltpu


def _round_up(v, m):
    return (v + m - 1) // m * m


# --------------------------------------------------------------------------
# Kernels
# --------------------------------------------------------------------------
def _basis_kernel_single_k(alpha_ref, x_ref, w_ref, o_ref, *, num_bases, n_pad):
    """Whole contraction (Kp == tk) in one grid step: no scratch, direct store.

    o[b, n] = sum_r alpha[b, r] * sum_k x[b, k] * w[k, r*Np + n]
    """
    x = x_ref[...]                      # (tm, Kp), bf16 in the production path
    alpha = alpha_ref[...]              # (tm, R), f32
    out = None
    for r in range(num_bases):          # static unroll: R is small (e.g. 4)
        # MXU: basis-r logits for this batch tile; the w slice is a static,
        # 128-lane-aligned view (free).
        part = jnp.dot(x, w_ref[:, r * n_pad:(r + 1) * n_pad],
                       preferred_element_type=jnp.float32)
        # VPU (f32): per-row coefficient, hidden under the next vmatmul push.
        part = alpha[:, r:r + 1] * part
        out = part if out is None else out + part
    o_ref[...] = out.astype(o_ref.dtype)


def _basis_kernel_multi_k(alpha_ref, x_ref, w_ref, o_ref, acc_ref, *,
                          num_bases, n_pad):
    """K split across the last grid axis (large state_size fallback).

    Per-basis partials accumulate into an (R, tm, Np) f32 scratch; the alpha
    combination runs once at k == last, keeping the k loop to pure MXU + add.
    """
    k = pl.program_id(1)

    @pl.when(k == 0)
    def _init():
        acc_ref[...] = jnp.zeros_like(acc_ref)

    x = x_ref[...]
    for r in range(num_bases):
        acc_ref[r] += jnp.dot(x, w_ref[:, r * n_pad:(r + 1) * n_pad],
                              preferred_element_type=jnp.float32)

    @pl.when(k == pl.num_programs(1) - 1)
    def _finalize():
        alpha = alpha_ref[...]
        out = alpha[:, 0:1] * acc_ref[0]
        for r in range(1, num_bases):
            out = out + alpha[:, r:r + 1] * acc_ref[r]
        o_ref[...] = out.astype(o_ref.dtype)


# --------------------------------------------------------------------------
# One-time weight packing (hoisted out of the per-call hot path)
# --------------------------------------------------------------------------
def prepare_basis_weights(bases, *, dtype=jnp.bfloat16, k_tile_max=512):
    """Pack (R, num_labels, state_size) PyTorch-layout basis weights once.

    Returns (w_packed, meta): w_packed is (Kp, R*Np), label axis lane-dense,
    contraction axis second-minor, zero-padded to tile-aligned sizes, cast to
    the matmul operand dtype (bf16 by default; f32 for exactness checks).
    """
    R, N, K = bases.shape
    n_pad = _round_up(N, 128)
    k_pad = _round_up(K, 128)
    if k_pad > k_tile_max:
        k_pad = _round_up(k_pad, k_tile_max)
    w = jnp.transpose(bases, (0, 2, 1))                        # (R, K, N)
    w = jnp.pad(w, ((0, 0), (0, k_pad - K), (0, n_pad - N)))   # zeros: no-op math
    # (Kp, R*Np): each k-tile of all R bases is one contiguous lane-dense slab.
    w = jnp.transpose(w, (1, 0, 2)).reshape(k_pad, R * n_pad)
    meta = dict(num_bases=R, num_labels=N, n_pad=n_pad, k_pad=k_pad,
                k_tile=min(k_pad, k_tile_max))
    return w.astype(dtype), meta


# --------------------------------------------------------------------------
# Fused basis matmul + alpha combination
# --------------------------------------------------------------------------
def basis_combined_matmul(alpha, x, w_packed, meta, *, tm_max=256):
    """logits = sum_r alpha[:, r:r+1] * (x @ W_r^T), fused on-chip."""
    B, R = alpha.shape
    _, K = x.shape
    n_pad, k_pad, k_tile = meta["n_pad"], meta["k_pad"], meta["k_tile"]
    N = meta["num_labels"]
    assert R == meta["num_bases"]
    assert w_packed.shape == (k_pad, R * n_pad)

    # Batch tile: multiple of 8 sublanes, at most tm_max, dividing the padded B.
    tm = min(_round_up(B, 8), _round_up(tm_max, 8))
    b_pad = _round_up(B, tm)

    # Per-call padding only touches the small activation tensors.
    if b_pad != B:
        alpha = jnp.pad(alpha, ((0, b_pad - B), (0, 0)))
    if b_pad != B or k_pad != K:
        x = jnp.pad(x, ((0, b_pad - B), (0, k_pad - K)))

    # bf16 matmul operands, f32 coefficients / accumulation / output.
    x = x.astype(w_packed.dtype)
    alpha = alpha.astype(jnp.float32)

    num_k = k_pad // k_tile
    itemsize = jnp.dtype(w_packed.dtype).itemsize

    if num_k == 1:
        grid = (b_pad // tm,)
        kernel = functools.partial(_basis_kernel_single_k,
                                   num_bases=R, n_pad=n_pad)
        in_specs = [
            pl.BlockSpec((tm, R), lambda i: (i, 0)),              # alpha
            pl.BlockSpec((tm, k_pad), lambda i: (i, 0)),          # x
            pl.BlockSpec((k_pad, R * n_pad), lambda i: (0, 0)),   # packed bases
        ]
        out_specs = pl.BlockSpec((tm, n_pad), lambda i: (i, 0))
        scratch_shapes = ()
        dims = ("parallel",)
        scratch_bytes = 0
    else:
        grid = (b_pad // tm, num_k)                               # reduction LAST
        kernel = functools.partial(_basis_kernel_multi_k,
                                   num_bases=R, n_pad=n_pad)
        in_specs = [
            pl.BlockSpec((tm, R), lambda i, k: (i, 0)),
            pl.BlockSpec((tm, k_tile), lambda i, k: (i, k)),
            pl.BlockSpec((k_tile, R * n_pad), lambda i, k: (k, 0)),
        ]
        out_specs = pl.BlockSpec((tm, n_pad), lambda i, k: (i, 0))
        scratch_shapes = (pltpu.VMEM((R, tm, n_pad), jnp.float32),)
        dims = ("parallel", "arbitrary")
        scratch_bytes = R * tm * n_pad * 4

    # Rough VMEM budget (double-buffered inputs + output + scratch).  Raise the
    # scoped limit only when production tiles need it.
    vmem_bytes = (2 * (tm * R * 4 + tm * k_tile * itemsize
                       + k_tile * R * n_pad * itemsize)
                  + 2 * tm * n_pad * 4 + scratch_bytes)
    cp_kwargs = dict(dimension_semantics=dims)
    if vmem_bytes > 24 * 1024 * 1024:
        cp_kwargs["vmem_limit_bytes"] = int(min(vmem_bytes + (8 << 20), 100 << 20))

    out = pl.pallas_call(
        kernel,
        out_shape=jax.ShapeDtypeStruct((b_pad, n_pad), jnp.float32),
        grid_spec=pltpu.PrefetchScalarGridSpec(
            num_scalar_prefetch=0,
            grid=grid,
            in_specs=in_specs,
            out_specs=out_specs,
            scratch_shapes=scratch_shapes,
        ),
        compiler_params=pltpu.CompilerParams(**cp_kwargs),
    )(alpha, x, w_packed)
    return out[:B, :N]


# --------------------------------------------------------------------------
# Coefficient path (gather + 2-layer MLP + activation) -- plain JAX.
# --------------------------------------------------------------------------
_ACT_FNS = {
    "none": lambda z: z,
    "sigmoid": jax.nn.sigmoid,
    "tanh": jnp.tanh,
    "relu": jax.nn.relu,
    "softmax": lambda z: jax.nn.softmax(z, axis=-1),
}


def compute_alpha(meta_indices, params, coef_act_fn):
    """alpha = coef_act_fn(C(cat([Emb_name(idx)], dim=1)))."""
    # TODO(synk): coefficient path (a few hundred bytes of work) stays in XLA;
    # fuse into the kernel prologue only if profiling shows the launch matters.
    embeds = [jnp.take(params["emb"][name], idx, axis=0)
              for name, idx in meta_indices.items()]
    e = jnp.concatenate(embeds, axis=-1)                 # (B, attribute_dim * U)
    h = jnp.tanh(e @ params["c1_w"] + params["c1_b"])    # (B, key_query_size)
    logits = h @ params["c2_w"] + params["c2_b"]         # (B, num_bases)
    return _ACT_FNS[coef_act_fn](logits)


def basis_cust_linear_forward(x, meta_indices, params, *, coef_act_fn="softmax"):
    alpha = compute_alpha(meta_indices, params, coef_act_fn)
    return basis_combined_matmul(alpha, x, params["w_packed"], params["w_meta"])


def reference_forward(x, meta_indices, params, *, coef_act_fn="softmax"):
    """Pure-JAX replica of the PyTorch forward (correctness check)."""
    alpha = compute_alpha(meta_indices, params, coef_act_fn)
    logits_on_bases = jnp.einsum("bk,rlk->brl", x, params["bases"])
    return jnp.einsum("br,brl->bl", alpha, logits_on_bases)


# --------------------------------------------------------------------------
if __name__ == "__main__":
    batch = 6
    state_size = 200
    num_labels = 100
    num_bases = 4
    attribute_dim = 8
    key_query_size = 16
    meta_units = [("user", 5), ("item", 7)]
    coef_act_fn = "softmax"

    keys = list(jax.random.split(jax.random.PRNGKey(0), 6 + 2 * len(meta_units)))

    def xavier(k, shape, fan_in, fan_out):
        limit = (6.0 / (fan_in + fan_out)) ** 0.5
        return jax.random.uniform(k, shape, jnp.float32, -limit, limit)

    params = {"emb": {}}
    meta_indices = {}
    for name, n_meta in meta_units:
        # meta parameters: uniform_ [-0.01, 0.01]  (CustModule.init_param)
        params["emb"][name] = jax.random.uniform(
            keys.pop(), (n_meta, attribute_dim), jnp.float32, -0.01, 0.01)
        meta_indices[name] = jax.random.randint(keys.pop(), (batch,), 0, n_meta)

    in_c = attribute_dim * len(meta_units)
    params["c1_w"] = xavier(keys.pop(), (in_c, key_query_size), in_c, key_query_size)
    params["c1_b"] = jnp.zeros((key_query_size,), jnp.float32)
    params["c2_w"] = xavier(keys.pop(), (key_query_size, num_bases),
                            key_query_size, num_bases)
    params["c2_b"] = jnp.zeros((num_bases,), jnp.float32)

    # Basis label-embedding matrices: PyTorch nn.Linear layout (labels, state),
    # xavier_uniform_.
    params["bases"] = xavier(keys.pop(), (num_bases, num_labels, state_size),
                             state_size, num_labels)

    x = jax.random.normal(keys.pop(), (batch, state_size), jnp.float32)

    ref = reference_forward(x, meta_indices, params, coef_act_fn=coef_act_fn)

    # --- f32 operands: exactness check against the pure-JAX reference.
    params["w_packed"], params["w_meta"] = prepare_basis_weights(
        params["bases"], dtype=jnp.float32)
    out_f32 = jax.block_until_ready(
        basis_cust_linear_forward(x, meta_indices, params, coef_act_fn=coef_act_fn))
    assert out_f32.shape == (batch, num_labels), out_f32.shape
    d32 = float(jnp.max(jnp.abs(out_f32 - ref)))
    assert jnp.allclose(out_f32, ref, atol=1e-3, rtol=1e-3), (
        f"f32 mismatch vs reference: max abs diff = {d32}")

    # --- bf16 operands: the production path recommended by the perf review
    # (looser tolerance: bf16 input rounding, f32 accumulation).
    params["w_packed"], params["w_meta"] = prepare_basis_weights(
        params["bases"], dtype=jnp.bfloat16)
    out_bf16 = jax.block_until_ready(
        basis_cust_linear_forward(x, meta_indices, params, coef_act_fn=coef_act_fn))
    assert out_bf16.shape == (batch, num_labels), out_bf16.shape
    dbf = float(jnp.max(jnp.abs(out_bf16 - ref)))
    assert jnp.allclose(out_bf16, ref, atol=5e-2, rtol=5e-2), (
        f"bf16 mismatch vs reference: max abs diff = {dbf}")

    print("KERNEL_OK")
</pallas_src>

<mosaic_0001>
module attributes {stable_mosaic.version = 11 : i64} {
  func.func @_basis_kernel_single_k(%arg0: i32, %arg1: memref<8x4xf32, #tpu.memory_space<vmem>>, %arg2: memref<8x256xf32, #tpu.memory_space<vmem>>, %arg3: memref<256x512xf32, #tpu.memory_space<vmem>>, %arg4: memref<8x128xf32, #tpu.memory_space<vmem>>) attributes {dimension_semantics = [#tpu.dimension_semantics<parallel>], iteration_bounds = array<i64: 1>, scalar_prefetch = 0 : i64, scratch_operands = 0 : i64, tpu.core_type = #tpu.core_type<tc>, window_params = [{transform_indices = @transform_0, window_bounds = array<i64: 8, 4>}, {transform_indices = @transform_1, window_bounds = array<i64: 8, 256>}, {pipeline_mode = #tpu.pipeline_mode<synchronous>, transform_indices = @transform_2, window_bounds = array<i64: 256, 512>}, {transform_indices = @transform_3, window_bounds = array<i64: 8, 128>}]} {
    %c0 = arith.constant 0 : index
    %c0_0 = arith.constant 0 : index
    %0 = vector.load %arg2[%c0, %c0_0] : memref<8x256xf32, #tpu.memory_space<vmem>>, vector<8x256xf32>
    %c0_1 = arith.constant 0 : index
    %c0_2 = arith.constant 0 : index
    %1 = vector.load %arg1[%c0_1, %c0_2] : memref<8x4xf32, #tpu.memory_space<vmem>>, vector<8x4xf32>
    %c0_3 = arith.constant 0 : index
    %c0_4 = arith.constant 0 : index
    %2 = vector.load %arg3[%c0_3, %c0_4] : memref<256x512xf32, #tpu.memory_space<vmem>>, vector<256x128xf32>
    %cst = arith.constant dense<0.000000e+00> : vector<8x128xf32>
    %3 = tpu.matmul %0, %2, %cst {dimension_numbers = #tpu.dot_dimension_numbers<[1], [0], [0], [1], [0, 0, 1, 1], [], []>} : vector<8x256xf32>, vector<256x128xf32>, vector<8x128xf32> -> vector<8x128xf32>
    %4 = vector.extract_strided_slice %1 {offsets = [0, 0], sizes = [8, 1], strides = [1, 1]} : vector<8x4xf32> to vector<8x1xf32>
    %5 = vector.broadcast %4 : vector<8x1xf32> to vector<8x128xf32>
    %6 = arith.mulf %5, %3 : vector<8x128xf32>
    %c0_5 = arith.constant 0 : index
    %c128 = arith.constant 128 : index
    %7 = vector.load %arg3[%c0_5, %c128] : memref<256x512xf32, #tpu.memory_space<vmem>>, vector<256x128xf32>
    %cst_6 = arith.constant dense<0.000000e+00> : vector<8x128xf32>
    %8 = tpu.matmul %0, %7, %cst_6 {dimension_numbers = #tpu.dot_dimension_numbers<[1], [0], [0], [1], [0, 0, 1, 1], [], []>} : vector<8x256xf32>, vector<256x128xf32>, vector<8x128xf32> -> vector<8x128xf32>
    %9 = vector.extract_strided_slice %1 {offsets = [0, 1], sizes = [8, 1], strides = [1, 1]} : vector<8x4xf32> to vector<8x1xf32>
    %10 = vector.broadcast %9 : vector<8x1xf32> to vector<8x128xf32>
    %11 = arith.mulf %10, %8 : vector<8x128xf32>
    %12 = arith.addf %6, %11 : vector<8x128xf32>
    %c0_7 = arith.constant 0 : index
    %c256 = arith.constant 256 : index
    %13 = vector.load %arg3[%c0_7, %c256] : memref<256x512xf32, #tpu.memory_space<vmem>>, vector<256x128xf32>
    %cst_8 = arith.constant dense<0.000000e+00> : vector<8x128xf32>
    %14 = tpu.matmul %0, %13, %cst_8 {dimension_numbers = #tpu.dot_dimension_numbers<[1], [0], [0], [1], [0, 0, 1, 1], [], []>} : vector<8x256xf32>, vector<256x128xf32>, vector<8x128xf32> -> vector<8x128xf32>
    %15 = vector.extract_strided_slice %1 {offsets = [0, 2], sizes = [8, 1], strides = [1, 1]} : vector<8x4xf32> to vector<8x1xf32>
    %16 = vector.broadcast %15 : vector<8x1xf32> to vector<8x128xf32>
    %17 = arith.mulf %16, %14 : vector<8x128xf32>
    %18 = arith.addf %12, %17 : vector<8x128xf32>
    %c0_9 = arith.constant 0 : index
    %c384 = arith.constant 384 : index
    %19 = vector.load %arg3[%c0_9, %c384] : memref<256x512xf32, #tpu.memory_space<vmem>>, vector<256x128xf32>
    %cst_10 = arith.constant dense<0.000000e+00> : vector<8x128xf32>
    %20 = tpu.matmul %0, %19, %cst_10 {dimension_numbers = #tpu.dot_dimension_numbers<[1], [0], [0], [1], [0, 0, 1, 1], [], []>} : vector<8x256xf32>, vector<256x128xf32>, vector<8x128xf32> -> vector<8x128xf32>
    %21 = vector.extract_strided_slice %1 {offsets = [0, 3], sizes = [8, 1], strides = [1, 1]} : vector<8x4xf32> to vector<8x1xf32>
    %22 = vector.broadcast %21 : vector<8x1xf32> to vector<8x128xf32>
    %23 = arith.mulf %22, %20 : vector<8x128xf32>
    %24 = arith.addf %18, %23 : vector<8x128xf32>
    %c0_11 = arith.constant 0 : index
    %c0_12 = arith.constant 0 : index
    %25 = vector.load %arg4[%c0_11, %c0_12] : memref<8x128xf32, #tpu.memory_space<vmem>>, vector<8x128xf32>
    tpu.vector_store %arg4[%c0_11, %c0_12], %24 {strides = array<i32>} : memref<8x128xf32, #tpu.memory_space<vmem>>, vector<8x128xf32>,
    return
  }
  func.func @transform_0(%arg0: i32) -> (i32, i32) {
    %c0_i32 = arith.constant 0 : i32
    %c0_i32_0 = arith.constant 0 : i32
    return %arg0, %c0_i32 : i32, i32
  }
  func.func @transform_1(%arg0: i32) -> (i32, i32) {
    %c0_i32 = arith.constant 0 : i32
    %c0_i32_0 = arith.constant 0 : i32
    return %arg0, %c0_i32 : i32, i32
  }
  func.func @transform_2(%arg0: i32) -> (i32, i32) {
    %c0_i32 = arith.constant 0 : i32
    %c0_i32_0 = arith.constant 0 : i32
    %c0_i32_1 = arith.constant 0 : i32
    return %c0_i32, %c0_i32_0 : i32, i32
  }
  func.func @transform_3(%arg0: i32) -> (i32, i32) {
    %c0_i32 = arith.constant 0 : i32
    %c0_i32_0 = arith.constant 0 : i32
    return %arg0, %c0_i32 : i32, i32
  }
}

</mosaic_0001>

<llo_original>
// kernel: tpu_custom_call.1
$region0: #{tpu_custom_call.1}
  #allocation0 [shape = 'u32[]', space=smem, size = 0x4, offset = 0x4, fixed_abs, tag = 'smem constant byte address 0x4 - core index']
  #allocation1 [shape = 'u32[144,128]{1,0:T(1,128)}', space=vmem, size = 0x12000, scoped, tag = 'internal scratch']
  %s0 = inlined_call_operand.vmem [shape: f32[8,4], index: 0, kind: input, shape index: {}]
  %s1 = inlined_call_operand.hbm [shape: f32[8,256], index: 1, kind: input, shape index: {}]
  %s2 = inlined_call_operand.hbm [shape: f32[256,512], index: 2, kind: input, shape index: {}]
  %s3 = inlined_call_operand.hbm [shape: f32[8,128], index: 3, kind: output, shape index: {}]
  %s4 = sld [smem:[#allocation0]]
  $region30: #{tpu_custom_call.1} parent=0
    _
  %s6 = ssub.s32 1, %s4
  %s7 = scalar_select 0, %s6, %s4
  $region1: #{tpu_custom_call.1} parent=0
    #allocation2 [shape = 'u8[8192]{0}', space=vmem, size = 0x2000, scoped, tag = 'input window, operand 1, single buffered']
    #allocation3 [shape = 's32[1]{0}', space=sflag, size = 0x4, scoped, tag = 'scoped memory for tpu_custom_call.1']
    #allocation4 [shape = 's32[1]{0}', space=sflag, size = 0x4, scoped, tag = 'scoped memory for tpu_custom_call.1']
    #allocation5 [shape = 'u8[524288]{0}', space=vmem, size = 0x80000, scoped, tag = 'input window, operand 2, single buffered']
    #allocation6 [shape = 's32[1]{0}', space=sflag, size = 0x4, scoped, tag = 'scoped memory for tpu_custom_call.1']
    #allocation7 [shape = 'u8[4096]{0}', space=vmem, size = 0x1000, scoped, tag = 'output window, operand 0, single buffered']
    %8 = vsyncpa [#allocation3], 0
    %9 = vsyncpa [#allocation6], 0
    %10 = vsyncpa [#allocation4], 0
    // Predicated region
    $region2: #{tpu_custom_call.1} parent=1 // pred_check
      _
    $region3: #{tpu_custom_call.1} parent=1 // pred_check_branch
      %12 = sbr.rel (0) target = $region5
    $region4: #{tpu_custom_call.1} parent=1 // pred_region
      _
    $region5: #{tpu_custom_call.1} parent=1 // pred_fallthru
      _
    // Predicated region
    $region6: #{tpu_custom_call.1} parent=1 // pred_check
      _
    $region7: #{tpu_custom_call.1} parent=1 // pred_check_branch
      %14 = sbr.rel (0) target = $region9
    $region8: #{tpu_custom_call.1} parent=1 // pred_region
      %s16 = ssub.s32 256, 256
      %17 = vsyncadd [#allocation3], %s16
      %s19 = sshll.u32 [#allocation2], 4
      %s20 = int_to_ptr.vmem [resolvable:$true] %s19
      %22 = dma.hbm_to_vmem [thread:$0]  %s1, 256, %s20, [#allocation3]
    $region9: #{tpu_custom_call.1} parent=1 // pred_fallthru
      _
    // Predicated region
    $region10: #{tpu_custom_call.1} parent=1 // pred_check
      _
    $region11: #{tpu_custom_call.1} parent=1 // pred_check_branch
      %24 = sbr.rel (0) target = $region13
    $region12: #{tpu_custom_call.1} parent=1 // pred_region
      %s26 = ssub.s32 16384, 16384
      %27 = vsyncadd [#allocation6], %s26
      %s28 = sshll.u32 [#allocation5], 4
      %s29 = int_to_ptr.vmem [resolvable:$true] %s28
      %34 = dma.hbm_to_vmem [thread:$0]  %s2, 16384, %s29, [#allocation6], 512, 512, 32
    $region13: #{tpu_custom_call.1} parent=1 // pred_fallthru
      _
    // Predicated region
    $region14: #{tpu_custom_call.1} parent=1 // pred_check
      _
    $region15: #{tpu_custom_call.1} parent=1 // pred_check_branch
      %36 = sbr.rel (0) target = $region17
    $region16: #{tpu_custom_call.1} parent=1 // pred_region
      %37 = dma.done [#allocation3], 256
    $region17: #{tpu_custom_call.1} parent=1 // pred_fallthru
      _
    // Predicated region
    $region18: #{tpu_custom_call.1} parent=1 // pred_check
      _
    $region19: #{tpu_custom_call.1} parent=1 // pred_check_branch
      %39 = sbr.rel (0) target = $region21
    $region20: #{tpu_custom_call.1} parent=1 // pred_region
      %40 = dma.done [#allocation6], 16384
    $region21: #{tpu_custom_call.1} parent=1 // pred_fallthru
      _
    %v41 = vld [vmem:[#allocation2] sm:$0xff]
    %v42 = vld [vmem:[#allocation2 + $0x8] sm:$0xff]
    %v43 = vld [vmem:[%s0] sm:$0xff]
    %v44 = vld [vmem:[#allocation5] sm:$0xff]
    %v45 = vld [vmem:[#allocation5 + $0x20] sm:$0xff]
    %v46 = vld [vmem:[#allocation5 + $0x40] sm:$0xff]
    %v47 = vld [vmem:[#allocation5 + $0x60] sm:$0xff]
    %v48 = vld [vmem:[#allocation5 + $0x80] sm:$0xff]
    %v49 = vld [vmem:[#allocation5 + $0xa0] sm:$0xff]
    %v50 = vld [vmem:[#allocation5 + $0xc0] sm:$0xff]
    %v51 = vld [vmem:[#allocation5 + $0xe0] sm:$0xff]
    %v52 = vld [vmem:[#allocation5 + $0x100] sm:$0xff]
    %v53 = vld [vmem:[#allocation5 + $0x120] sm:$0xff]
    %v54 = vld [vmem:[#allocation5 + $0x140] sm:$0xff]
    %v55 = vld [vmem:[#allocation5 + $0x160] sm:$0xff]
    %v56 = vld [vmem:[#allocation5 + $0x180] sm:$0xff]
    %v57 = vld [vmem:[#allocation5 + $0x1a0] sm:$0xff]
    %v58 = vld [vmem:[#allocation5 + $0x1c0] sm:$0xff]
    %v59 = vld [vmem:[#allocation5 + $0x1e0] sm:$0xff]
    %v60 = vld [vmem:[#allocation5 + $0x200] sm:$0xff]
    %v61 = vld [vmem:[#allocation5 + $0x220] sm:$0xff]
    %v62 = vld [vmem:[#allocation5 + $0x240] sm:$0xff]
    %v63 = vld [vmem:[#allocation5 + $0x260] sm:$0xff]
    %v64 = vld [vmem:[#allocation5 + $0x280] sm:$0xff]
    %v65 = vld [vmem:[#allocation5 + $0x2a0] sm:$0xff]
    %v66 = vld [vmem:[#allocation5 + $0x2c0] sm:$0xff]
    %v67 = vld [vmem:[#allocation5 + $0x2e0] sm:$0xff]
    %v68 = vld [vmem:[#allocation5 + $0x300] sm:$0xff]
    %v69 = vld [vmem:[#allocation5 + $0x320] sm:$0xff]
    %v70 = vld [vmem:[#allocation5 + $0x340] sm:$0xff]
    %v71 = vld [vmem:[#allocation5 + $0x360] sm:$0xff]
    %v72 = vld [vmem:[#allocation5 + $0x380] sm:$0xff]
    %v73 = vld [vmem:[#allocation5 + $0x3a0] sm:$0xff]
    %v74 = vld [vmem:[#allocation5 + $0x3c0] sm:$0xff]
    %v75 = vld [vmem:[#allocation5 + $0x3e0] sm:$0xff]
    %76 = vmatprep.subr.mxu0 0.0
    %77 = vmatpush1.msra.mxu0 %v59
    %78 = vmatprep.subr.mxu0 0.0
    %79 = vmatpush1.msra.mxu0 %v58
    %80 = vmatprep.subr.mxu0 0.0
    %81 = vmatpush1.msra.mxu0 %v57
    %82 = vmatprep.subr.mxu0 0.0
    %83 = vmatpush1.msra.mxu0 %v56
    %84 = vmatprep.subr.mxu0 0.0
    %85 = vmatpush1.msra.mxu0 %v55
    %86 = vmatprep.subr.mxu0 0.0
    %87 = vmatpush1.msra.mxu0 %v54
    %88 = vmatprep.subr.mxu0 0.0
    %89 = vmatpush1.msra.mxu0 %v53
    %90 = vmatprep.subr.mxu0 0.0
    %91 = vmatpush1.msra.mxu0 %v52
    %92 = vmatprep.subr.mxu0 0.0
    %93 = vmatpush1.msra.mxu0 %v51
    %94 = vmatprep.subr.mxu0 0.0
    %95 = vmatpush1.msra.mxu0 %v50
    %96 = vmatprep.subr.mxu0 0.0
    %97 = vmatpush1.msra.mxu0 %v49
    %98 = vmatprep.subr.mxu0 0.0
    %99 = vmatpush1.msra.mxu0 %v48
    %100 = vmatprep.subr.mxu0 0.0
    %101 = vmatpush1.msra.mxu0 %v47
    %102 = vmatprep.subr.mxu0 0.0
    %103 = vmatpush1.msra.mxu0 %v46
    %104 = vmatprep.subr.mxu0 0.0
    %105 = vmatpush1.msra.mxu0 %v45
    %106 = vmatprep.subr.mxu0 0.0
    %107 = vmatpush1.msra.mxu0 %v44
    %108 = vmatprep.subr.mxu0 0.0
    %109 = vmatpush2.msra.mxu0 %v75
    %110 = vmatprep.subr.mxu0 0.0
    %111 = vmatpush2.msra.mxu0 %v74
    %112 = vmatprep.subr.mxu0 0.0
    %113 = vmatpush2.msra.mxu0 %v73
    %114 = vmatprep.subr.mxu0 0.0
    %115 = vmatpush2.msra.mxu0 %v72
    %116 = vmatprep.subr.mxu0 0.0
    %117 = vmatpush2.msra.mxu0 %v71
    %118 = vmatprep.subr.mxu0 0.0
    %119 = vmatpush2.msra.mxu0 %v70
    %120 = vmatprep.subr.mxu0 0.0
    %121 = vmatpush2.msra.mxu0 %v69
    %122 = vmatprep.subr.mxu0 0.0
    %123 = vmatpush2.msra.mxu0 %v68
    %124 = vmatprep.subr.mxu0 0.0
    %125 = vmatpush2.msra.mxu0 %v67
    %126 = vmatprep.subr.mxu0 0.0
    %127 = vmatpush2.msra.mxu0 %v66
    %128 = vmatprep.subr.mxu0 0.0
    %129 = vmatpush2.msra.mxu0 %v65
    %130 = vmatprep.subr.mxu0 0.0
    %131 = vmatpush2.msra.mxu0 %v64
    %132 = vmatprep.subr.mxu0 0.0
    %133 = vmatpush2.msra.mxu0 %v63
    %134 = vmatprep.subr.mxu0 0.0
    %135 = vmatpush2.msra.mxu0 %v62
    %136 = vmatprep.subr.mxu0 0.0
    %137 = vmatpush2.msra.mxu0 %v61
    %138 = vmatprep.subr.mxu0 0.0
    %139 = vmatpush2.msra.mxu0 %v60
    %140 = vmatprep.mubr.f32.mxu0 %v42
    %141 = vmatmul.mubr.f32.gmra.mxu0 %v41
    %v142 = vpop.f32.mrf.mxu0
    %v143 = vadd.f32 0.0, %v142
    %v144 = vpop.f32.mrf.mxu0
    %145 = vdwg.mxu0
    %147 = vset.pattern.permute.xlu0 0
    %148 = vperm.xlu0 %147, %v43
    %v149 = vpop.permute.xlu0 %148
    %v151 = vmul.f32 %v149, %v143
    %v152 = vld [vmem:[#allocation5 + $0x8] sm:$0xff]
    %v153 = vld [vmem:[#allocation5 + $0x28] sm:$0xff]
    %v154 = vld [vmem:[#allocation5 + $0x48] sm:$0xff]
    %v155 = vld [vmem:[#allocation5 + $0x68] sm:$0xff]
    %v156 = vld [vmem:[#allocation5 + $0x88] sm:$0xff]
    %v157 = vld [vmem:[#allocation5 + $0xa8] sm:$0xff]
    %v158 = vld [vmem:[#allocation5 + $0xc8] sm:$0xff]
    %v159 = vld [vmem:[#allocation5 + $0xe8] sm:$0xff]
    %v160 = vld [vmem:[#allocation5 + $0x108] sm:$0xff]
    %v161 = vld [vmem:[#allocation5 + $0x128] sm:$0xff]
    %v162 = vld [vmem:[#allocation5 + $0x148] sm:$0xff]
    %v163 = vld [vmem:[#allocation5 + $0x168] sm:$0xff]
    %v164 = vld [vmem:[#allocation5 + $0x188] sm:$0xff]
    %v165 = vld [vmem:[#allocation5 + $0x1a8] sm:$0xff]
    %v166 = vld [vmem:[#allocation5 + $0x1c8] sm:$0xff]
    %v167 = vld [vmem:[#allocation5 + $0x1e8] sm:$0xff]
    %v168 = vld [vmem:[#allocation5 + $0x208] sm:$0xff]
    %v169 = vld [vmem:[#allocation5 + $0x228] sm:$0xff]
    %v170 = vld [vmem:[#allocation5 + $0x248] sm:$0xff]
    %v171 = vld [vmem:[#allocation5 + $0x268] sm:$0xff]
    %v172 = vld [vmem:[#allocation5 + $0x288] sm:$0xff]
    %v173 = vld [vmem:[#allocation5 + $0x2a8] sm:$0xff]
    %v174 = vld [vmem:[#allocation5 + $0x2c8] sm:$0xff]
    %v175 = vld [vmem:[#allocation5 + $0x2e8] sm:$0xff]
    %v176 = vld [vmem:[#allocation5 + $0x308] sm:$0xff]
    %v177 = vld [vmem:[#allocation5 + $0x328] sm:$0xff]
    %v178 = vld [vmem:[#allocation5 + $0x348] sm:$0xff]
    %v179 = vld [vmem:[#allocation5 + $0x368] sm:$0xff]
    %v180 = vld [vmem:[#allocation5 + $0x388] sm:$0xff]
    %v181 = vld [vmem:[#allocation5 + $0x3a8] sm:$0xff]
    %v182 = vld [vmem:[#allocation5 + $0x3c8] sm:$0xff]
    %v183 = vld [vmem:[#allocation5 + $0x3e8] sm:$0xff]
    %184 = vmatprep.subr.mxu0 0.0
    %185 = vmatpush1.msra.mxu0 %v167
    %186 = vmatprep.subr.mxu0 0.0
    %187 = vmatpush1.msra.mxu0 %v166
    %188 = vmatprep.subr.mxu0 0.0
    %189 = vmatpush1.msra.mxu0 %v165
    %190 = vmatprep.subr.mxu0 0.0
    %191 = vmatpush1.msra.mxu0 %v164
    %192 = vmatprep.subr.mxu0 0.0
    %193 = vmatpush1.msra.mxu0 %v163
    %194 = vmatprep.subr.mxu0 0.0
    %195 = vmatpush1.msra.mxu0 %v162
    %196 = vmatprep.subr.mxu0 0.0
    %197 = vmatpush1.msra.mxu0 %v161
    %198 = vmatprep.subr.mxu0 0.0
    %199 = vmatpush1.msra.mxu0 %v160
    %200 = vmatprep.subr.mxu0 0.0
    %201 = vmatpush1.msra.mxu0 %v159
    %202 = vmatprep.subr.mxu0 0.0
    %203 = vmatpush1.msra.mxu0 %v158
    %204 = vmatprep.subr.mxu0 0.0
    %205 = vmatpush1.msra.mxu0 %v157
    %206 = vmatprep.subr.mxu0 0.0
    %207 = vmatpush1.msra.mxu0 %v156
    %208 = vmatprep.subr.mxu0 0.0
    %209 = vmatpush1.msra.mxu0 %v155
    %210 = vmatprep.subr.mxu0 0.0
    %211 = vmatpush1.msra.mxu0 %v154
    %212 = vmatprep.subr.mxu0 0.0
    %213 = vmatpush1.msra.mxu0 %v153
    %214 = vmatprep.subr.mxu0 0.0
    %215 = vmatpush1.msra.mxu0 %v152
    %216 = vmatprep.subr.mxu0 0.0
    %217 = vmatpush2.msra.mxu0 %v183
    %218 = vmatprep.subr.mxu0 0.0
    %219 = vmatpush2.msra.mxu0 %v182
    %220 = vmatprep.subr.mxu0 0.0
    %221 = vmatpush2.msra.mxu0 %v181
    %222 = vmatprep.subr.mxu0 0.0
    %223 = vmatpush2.msra.mxu0 %v180
    %224 = vmatprep.subr.mxu0 0.0
    %225 = vmatpush2.msra.mxu0 %v179
    %226 = vmatprep.subr.mxu0 0.0
    %227 = vmatpush2.msra.mxu0 %v178
    %228 = vmatprep.subr.mxu0 0.0
    %229 = vmatpush2.msra.mxu0 %v177
    %230 = vmatprep.subr.mxu0 0.0
    %231 = vmatpush2.msra.mxu0 %v176
    %232 = vmatprep.subr.mxu0 0.0
    %233 = vmatpush2.msra.mxu0 %v175
    %234 = vmatprep.subr.mxu0 0.0
    %235 = vmatpush2.msra.mxu0 %v174
    %236 = vmatprep.subr.mxu0 0.0
    %237 = vmatpush2.msra.mxu0 %v173
    %238 = vmatprep.subr.mxu0 0.0
    %239 = vmatpush2.msra.mxu0 %v172
    %240 = vmatprep.subr.mxu0 0.0
    %241 = vmatpush2.msra.mxu0 %v171
    %242 = vmatprep.subr.mxu0 0.0
    %243 = vmatpush2.msra.mxu0 %v170
    %244 = vmatprep.subr.mxu0 0.0
    %245 = vmatpush2.msra.mxu0 %v169
    %246 = vmatprep.subr.mxu0 0.0
    %247 = vmatpush2.msra.mxu0 %v168
    %248 = vmatprep.mubr.f32.mxu0 %v42
    %249 = vmatmul.mubr.f32.gmra.mxu0 %v41
    %v250 = vpop.f32.mrf.mxu0
    %v251 = vadd.f32 0.0, %v250
    %v252 = vpop.f32.mrf.mxu0
    %253 = vdwg.mxu0
    %254 = vset.pattern.permute.xlu0 1
    %255 = vperm.xlu0 %254, %v43
    %v256 = vpop.permute.xlu0 %255
    %v258 = vmul.f32 %v256, %v251
    %v259 = vadd.f32 %v151, %v258
    %v260 = vld [vmem:[#allocation5 + $0x10] sm:$0xff]
    %v261 = vld [vmem:[#allocation5 + $0x30] sm:$0xff]
    %v262 = vld [vmem:[#allocation5 + $0x50] sm:$0xff]
    %v263 = vld [vmem:[#allocation5 + $0x70] sm:$0xff]
    %v264 = vld [vmem:[#allocation5 + $0x90] sm:$0xff]
    %v265 = vld [vmem:[#allocation5 + $0xb0] sm:$0xff]
    %v266 = vld [vmem:[#allocation5 + $0xd0] sm:$0xff]
    %v267 = vld [vmem:[#allocation5 + $0xf0] sm:$0xff]
    %v268 = vld [vmem:[#allocation5 + $0x110] sm:$0xff]
    %v269 = vld [vmem:[#allocation5 + $0x130] sm:$0xff]
    %v270 = vld [vmem:[#allocation5 + $0x150] sm:$0xff]
    %v271 = vld [vmem:[#allocation5 + $0x170] sm:$0xff]
    %v272 = vld [vmem:[#allocation5 + $0x190] sm:$0xff]
    %v273 = vld [vmem:[#allocation5 + $0x1b0] sm:$0xff]
    %v274 = vld [vmem:[#allocation5 + $0x1d0] sm:$0xff]
    %v275 = vld [vmem:[#allocation5 + $0x1f0] sm:$0xff]
    %v276 = vld [vmem:[#allocation5 + $0x210] sm:$0xff]
    %v277 = vld [vmem:[#allocation5 + $0x230] sm:$0xff]
    %v278 = vld [vmem:[#allocation5 + $0x250] sm:$0xff]
    %v279 = vld [vmem:[#allocation5 + $0x270] sm:$0xff]
    %v280 = vld [vmem:[#allocation5 + $0x290] sm:$0xff]
    %v281 = vld [vmem:[#allocation5 + $0x2b0] sm:$0xff]
    %v282 = vld [vmem:[#allocation5 + $0x2d0] sm:$0xff]
    %v283 = vld [vmem:[#allocation5 + $0x2f0] sm:$0xff]
    %v284 = vld [vmem:[#allocation5 + $0x310] sm:$0xff]
    %v285 = vld [vmem:[#allocation5 + $0x330] sm:$0xff]
    %v286 = vld [vmem:[#allocation5 + $0x350] sm:$0xff]
    %v287 = vld [vmem:[#allocation5 + $0x370] sm:$0xff]
    %v288 = vld [vmem:[#allocation5 + $0x390] sm:$0xff]
    %v289 = vld [vmem:[#allocation5 + $0x3b0] sm:$0xff]
    %v290 = vld [vmem:[#allocation5 + $0x3d0] sm:$0xff]
    %v291 = vld [vmem:[#allocation5 + $0x3f0] sm:$0xff]
    %292 = vmatprep.subr.mxu0 0.0
    %293 = vmatpush1.msra.mxu0 %v275
    %294 = vmatprep.subr.mxu0 0.0
    %295 = vmatpush1.msra.mxu0 %v274
    %296 = vmatprep.subr.mxu0 0.0
    %297 = vmatpush1.msra.mxu0 %v273
    %298 = vmatprep.subr.mxu0 0.0
    %299 = vmatpush1.msra.mxu0 %v272
    %300 = vmatprep.subr.mxu0 0.0
    %301 = vmatpush1.msra.mxu0 %v271
    %302 = vmatprep.subr.mxu0 0.0
    %303 = vmatpush1.msra.mxu0 %v270
    %304 = vmatprep.subr.mxu0 0.0
    %305 = vmatpush1.msra.mxu0 %v269
    %306 = vmatprep.subr.mxu0 0.0
    %307 = vmatpush1.msra.mxu0 %v268
    %308 = vmatprep.subr.mxu0 0.0
    %309 = vmatpush1.msra.mxu0 %v267
    %310 = vmatprep.subr.mxu0 0.0
    %311 = vmatpush1.msra.mxu0 %v266
    %312 = vmatprep.subr.mxu0 0.0
    %313 = vmatpush1.msra.mxu0 %v265
    %314 = vmatprep.subr.mxu0 0.0
    %315 = vmatpush1.msra.mxu0 %v264
    %316 = vmatprep.subr.mxu0 0.0
    %317 = vmatpush1.msra.mxu0 %v263
    %318 = vmatprep.subr.mxu0 0.0
    %319 = vmatpush1.msra.mxu0 %v262
    %320 = vmatprep.subr.mxu0 0.0
    %321 = vmatpush1.msra.mxu0 %v261
    %322 = vmatprep.subr.mxu0 0.0
    %323 = vmatpush1.msra.mxu0 %v260
    %324 = vmatprep.subr.mxu0 0.0
    %325 = vmatpush2.msra.mxu0 %v291
    %326 = vmatprep.subr.mxu0 0.0
    %327 = vmatpush2.msra.mxu0 %v290
    %328 = vmatprep.subr.mxu0 0.0
    %329 = vmatpush2.msra.mxu0 %v289
    %330 = vmatprep.subr.mxu0 0.0
    %331 = vmatpush2.msra.mxu0 %v288
    %332 = vmatprep.subr.mxu0 0.0
    %333 = vmatpush2.msra.mxu0 %v287
    %334 = vmatprep.subr.mxu0 0.0
    %335 = vmatpush2.msra.mxu0 %v286
    %336 = vmatprep.subr.mxu0 0.0
    %337 = vmatpush2.msra.mxu0 %v285
    %338 = vmatprep.subr.mxu0 0.0
    %339 = vmatpush2.msra.mxu0 %v284
    %340 = vmatprep.subr.mxu0 0.0
    %341 = vmatpush2.msra.mxu0 %v283
    %342 = vmatprep.subr.mxu0 0.0
    %343 = vmatpush2.msra.mxu0 %v282
    %344 = vmatprep.subr.mxu0 0.0
    %345 = vmatpush2.msra.mxu0 %v281
    %346 = vmatprep.subr.mxu0 0.0
    %347 = vmatpush2.msra.mxu0 %v280
    %348 = vmatprep.subr.mxu0 0.0
    %349 = vmatpush2.msra.mxu0 %v279
    %350 = vmatprep.subr.mxu0 0.0
    %351 = vmatpush2.msra.mxu0 %v278
    %352 = vmatprep.subr.mxu0 0.0
    %353 = vmatpush2.msra.mxu0 %v277
    %354 = vmatprep.subr.mxu0 0.0
    %355 = vmatpush2.msra.mxu0 %v276
    %356 = vmatprep.mubr.f32.mxu0 %v42
    %357 = vmatmul.mubr.f32.gmra.mxu0 %v41
    %v358 = vpop.f32.mrf.mxu0
    %v359 = vadd.f32 0.0, %v358
    %v360 = vpop.f32.mrf.mxu0
    %361 = vdwg.mxu0
    %362 = vset.pattern.permute.xlu0 2
    %363 = vperm.xlu0 %362, %v43
    %v364 = vpop.permute.xlu0 %363
    %v366 = vmul.f32 %v364, %v359
    %v367 = vadd.f32 %v259, %v366
    %v368 = vld [vmem:[#allocation5 + $0x18] sm:$0xff]
    %v369 = vld [vmem:[#allocation5 + $0x38] sm:$0xff]
    %v370 = vld [vmem:[#allocation5 + $0x58] sm:$0xff]
    %v371 = vld [vmem:[#allocation5 + $0x78] sm:$0xff]
    %v372 = vld [vmem:[#allocation5 + $0x98] sm:$0xff]
    %v373 = vld [vmem:[#allocation5 + $0xb8] sm:$0xff]
    %v374 = vld [vmem:[#allocation5 + $0xd8] sm:$0xff]
    %v375 = vld [vmem:[#allocation5 + $0xf8] sm:$0xff]
    %v376 = vld [vmem:[#allocation5 + $0x118] sm:$0xff]
    %v377 = vld [vmem:[#allocation5 + $0x138] sm:$0xff]
    %v378 = vld [vmem:[#allocation5 + $0x158] sm:$0xff]
    %v379 = vld [vmem:[#allocation5 + $0x178] sm:$0xff]
    %v380 = vld [vmem:[#allocation5 + $0x198] sm:$0xff]
    %v381 = vld [vmem:[#allocation5 + $0x1b8] sm:$0xff]
    %v382 = vld [vmem:[#allocation5 + $0x1d8] sm:$0xff]
    %v383 = vld [vmem:[#allocation5 + $0x1f8] sm:$0xff]
    %v384 = vld [vmem:[#allocation5 + $0x218] sm:$0xff]
    %v385 = vld [vmem:[#allocation5 + $0x238] sm:$0xff]
    %v386 = vld [vmem:[#allocation5 + $0x258] sm:$0xff]
    %v387 = vld [vmem:[#allocation5 + $0x278] sm:$0xff]
    %v388 = vld [vmem:[#allocation5 + $0x298] sm:$0xff]
    %v389 = vld [vmem:[#allocation5 + $0x2b8] sm:$0xff]
    %v390 = vld [vmem:[#allocation5 + $0x2d8] sm:$0xff]
    %v391 = vld [vmem:[#allocation5 + $0x2f8] sm:$0xff]
    %v392 = vld [vmem:[#allocation5 + $0x318] sm:$0xff]
    %v393 = vld [vmem:[#allocation5 + $0x338] sm:$0xff]
    %v394 = vld [vmem:[#allocation5 + $0x358] sm:$0xff]
    %v395 = vld [vmem:[#allocation5 + $0x378] sm:$0xff]
    %v396 = vld [vmem:[#allocation5 + $0x398] sm:$0xff]
    %v397 = vld [vmem:[#allocation5 + $0x3b8] sm:$0xff]
    %v398 = vld [vmem:[#allocation5 + $0x3d8] sm:$0xff]
    %v399 = vld [vmem:[#allocation5 + $0x3f8] sm:$0xff]
    %400 = vmatprep.subr.mxu0 0.0
    %401 = vmatpush1.msra.mxu0 %v383
    %402 = vmatprep.subr.mxu0 0.0
    %403 = vmatpush1.msra.mxu0 %v382
    %404 = vmatprep.subr.mxu0 0.0
    %405 = vmatpush1.msra.mxu0 %v381
    %406 = vmatprep.subr.mxu0 0.0
    %407 = vmatpush1.msra.mxu0 %v380
    %408 = vmatprep.subr.mxu0 0.0
    %409 = vmatpush1.msra.mxu0 %v379
    %410 = vmatprep.subr.mxu0 0.0
    %411 = vmatpush1.msra.mxu0 %v378
    %412 = vmatprep.subr.mxu0 0.0
    %413 = vmatpush1.msra.mxu0 %v377
    %414 = vmatprep.subr.mxu0 0.0
    %415 = vmatpush1.msra.mxu0 %v376
    %416 = vmatprep.subr.mxu0 0.0
    %417 = vmatpush1.msra.mxu0 %v375
    %418 = vmatprep.subr.mxu0 0.0
    %419 = vmatpush1.msra.mxu0 %v374
    %420 = vmatprep.subr.mxu0 0.0
    %421 = vmatpush1.msra.mxu0 %v373
    %422 = vmatprep.subr.mxu0 0.0
    %423 = vmatpush1.msra.mxu0 %v372
    %424 = vmatprep.subr.mxu0 0.0
    %425 = vmatpush1.msra.mxu0 %v371
    %426 = vmatprep.subr.mxu0 0.0
    %427 = vmatpush1.msra.mxu0 %v370
    %428 = vmatprep.subr.mxu0 0.0
    %429 = vmatpush1.msra.mxu0 %v369
    %430 = vmatprep.subr.mxu0 0.0
    %431 = vmatpush1.msra.mxu0 %v368
    %432 = vmatprep.subr.mxu0 0.0
    %433 = vmatpush2.msra.mxu0 %v399
    %434 = vmatprep.subr.mxu0 0.0
    %435 = vmatpush2.msra.mxu0 %v398
    %436 = vmatprep.subr.mxu0 0.0
    %437 = vmatpush2.msra.mxu0 %v397
    %438 = vmatprep.subr.mxu0 0.0
    %439 = vmatpush2.msra.mxu0 %v396
    %440 = vmatprep.subr.mxu0 0.0
    %441 = vmatpush2.msra.mxu0 %v395
    %442 = vmatprep.subr.mxu0 0.0
    %443 = vmatpush2.msra.mxu0 %v394
    %444 = vmatprep.subr.mxu0 0.0
    %445 = vmatpush2.msra.mxu0 %v393
    %446 = vmatprep.subr.mxu0 0.0
    %447 = vmatpush2.msra.mxu0 %v392
    %448 = vmatprep.subr.mxu0 0.0
    %449 = vmatpush2.msra.mxu0 %v391
    %450 = vmatprep.subr.mxu0 0.0
    %451 = vmatpush2.msra.mxu0 %v390
    %452 = vmatprep.subr.mxu0 0.0
    %453 = vmatpush2.msra.mxu0 %v389
    %454 = vmatprep.subr.mxu0 0.0
    %455 = vmatpush2.msra.mxu0 %v388
    %456 = vmatprep.subr.mxu0 0.0
    %457 = vmatpush2.msra.mxu0 %v387
    %458 = vmatprep.subr.mxu0 0.0
    %459 = vmatpush2.msra.mxu0 %v386
    %460 = vmatprep.subr.mxu0 0.0
    %461 = vmatpush2.msra.mxu0 %v385
    %462 = vmatprep.subr.mxu0 0.0
    %463 = vmatpush2.msra.mxu0 %v384
    %464 = vmatprep.mubr.f32.mxu0 %v42
    %465 = vmatmul.mubr.f32.gmra.mxu0 %v41
    %v466 = vpop.f32.mrf.mxu0
    %v467 = vadd.f32 0.0, %v466
    %v468 = vpop.f32.mrf.mxu0
    %469 = vdwg.mxu0
    %470 = vset.pattern.permute.xlu0 3
    %471 = vperm.xlu0 %470, %v43
    %v472 = vpop.permute.xlu0 %471
    %v474 = vmul.f32 %v472, %v467
    %v475 = vadd.f32 %v367, %v474
    %476 = vst [vmem:[#allocation7] sm:$0xff] %v475
    // Predicated region
    $region22: #{tpu_custom_call.1} parent=1 // pred_check
      _
    $region23: #{tpu_custom_call.1} parent=1 // pred_check_branch
      %478 = sbr.rel (0) target = $region25
    $region24: #{tpu_custom_call.1} parent=1 // pred_region
      %s480 = ssub.s32 128, 128
      %481 = vsyncadd [#allocation4], %s480
      %s483 = sshll.u32 [#allocation7], 4
      %s484 = int_to_ptr.vmem [resolvable:$true] %s483
      %486 = dma.vmem_to_hbm [thread:$0]  %s484, 128, %s3, [#allocation4]
    $region25: #{tpu_custom_call.1} parent=1 // pred_fallthru
      _
    // Predicated region
    $region26: #{tpu_custom_call.1} parent=1 // pred_check
      _
    $region27: #{tpu_custom_call.1} parent=1 // pred_check_branch
      %488 = sbr.rel (0) target = $region29
    $region28: #{tpu_custom_call.1} parent=1 // pred_region
      %489 = dma.done [#allocation4], 128
    $region29: #{tpu_custom_call.1} parent=1 // pred_fallthru
      _
    %490 = vsyncpa [#allocation3], 1
    %491 = vsyncpa [#allocation6], 1
    %492 = vsyncpa [#allocation4], 1

</llo_original>
